<compile_context>
chip_gen: v7x
topology: tpu7x:2x2x1
jax: 0.10.0
libtpu: 0.0.40
codegen_flags: <defaults>
</compile_context>

<pallas_src>
import functools

import jax
import jax.numpy as jnp
from jax import lax
from jax.experimental import pallas as pl
from jax.experimental.pallas import tpu as pltpu

F_IN = 21            # original input features
F_PAD = 32           # padded contraction dim for layer 1
D1, D2, D3, D4 = 64, 128, 256, 128
D_OUT = 7
D_OUT_PAD = 8        # narrow lane-padded output width (block == full array dim)
W5_LANES = 128       # w5 kept lane-dense in VMEM; result sliced to D_OUT_PAD
BN_EPS = 1e-5
FUSE_MAX_ROWS = 2048 # single-launch fused path (whole batch fits VMEM easily)
VMEM_LIMIT = 32 * 1024 * 1024


# ----------------------------------------------------------------------------
# shared per-row compute (values, not refs)
# ----------------------------------------------------------------------------
def _cnn_stack(x, w1, b1, w2, b2, w3, b3):
    """cnn_layers: 3x (Linear + ReLU). bf16 MXU operands, f32 accumulation."""
    h = jnp.dot(x, w1, preferred_element_type=jnp.float32)
    h = jnp.maximum(h + b1, 0.0)
    h = jnp.dot(h.astype(jnp.bfloat16), w2, preferred_element_type=jnp.float32)
    h = jnp.maximum(h + b2, 0.0)
    h = jnp.dot(h.astype(jnp.bfloat16), w3, preferred_element_type=jnp.float32)
    h = jnp.maximum(h + b3, 0.0)
    return h                                           # (rows, 256) f32


def _fc_stack(h_bn, w4, b4, w5, b5):
    """fc_layers: Linear + ReLU + Dropout(identity) + Linear (lane-padded)."""
    h = jnp.dot(h_bn.astype(jnp.bfloat16), w4, preferred_element_type=jnp.float32)
    h = jnp.maximum(h + b4, 0.0)
    # Dropout(0.9): identity in eval mode (see module-level TODO).
    out = jnp.dot(h.astype(jnp.bfloat16), w5, preferred_element_type=jnp.float32)
    return out + b5                                    # (rows, W5_LANES) f32


# ----------------------------------------------------------------------------
# fused single-launch kernel (small/medium batches)
# ----------------------------------------------------------------------------
def _fused_kernel(x_ref, w1_ref, b1_ref, w2_ref, b2_ref, w3_ref, b3_ref,
                  gamma_ref, beta_ref, w4_ref, b4_ref, w5_ref, b5_ref,
                  out_ref, *, n_valid):
    h = _cnn_stack(x_ref[...], w1_ref[...], b1_ref[...], w2_ref[...],
                   b2_ref[...], w3_ref[...], b3_ref[...])
    rows = h.shape[0]
    row_id = lax.broadcasted_iota(jnp.int32, (rows, 1), 0)
    valid = (row_id < n_valid).astype(jnp.float32)     # mask padded rows
    hm = h * valid
    inv_n = 1.0 / float(n_valid)
    mean = jnp.sum(hm, axis=0, keepdims=True) * inv_n
    var = jnp.maximum(jnp.sum(hm * hm, axis=0, keepdims=True) * inv_n
                      - mean * mean, 0.0)              # biased variance
    scale = gamma_ref[...] * lax.rsqrt(var + BN_EPS)   # fold BN into scale/shift
    shift = beta_ref[...] - mean * scale
    out = _fc_stack(h * scale + shift, w4_ref[...], b4_ref[...],
                    w5_ref[...], b5_ref[...])
    out_ref[...] = out[:, :D_OUT_PAD]                  # narrow f32 store


# ----------------------------------------------------------------------------
# tiled pass 1: per-tile BN partial statistics (fully "parallel" grid)
# ----------------------------------------------------------------------------
def _stats_kernel(x_ref, w1_ref, b1_ref, w2_ref, b2_ref, w3_ref, b3_ref,
                  psum_ref, psq_ref, *, n_valid, tile_n):
    i = pl.program_id(0)
    h = _cnn_stack(x_ref[...], w1_ref[...], b1_ref[...], w2_ref[...],
                   b2_ref[...], w3_ref[...], b3_ref[...])
    row_id = i * tile_n + lax.broadcasted_iota(jnp.int32, (tile_n, 1), 0)
    valid = (row_id < n_valid).astype(jnp.float32)     # mask padded rows
    hm = h * valid
    # Write partial sums into row 0 of an (8, 256) block (layout-aligned, no
    # revisited accumulator -> grid stays "parallel" for v7x megacore).
    row0 = lax.broadcasted_iota(jnp.int32, (8, 1), 0) == 0
    psum_ref[...] = jnp.where(row0, jnp.sum(hm, axis=0, keepdims=True), 0.0)
    psq_ref[...] = jnp.where(row0, jnp.sum(hm * hm, axis=0, keepdims=True), 0.0)


# ----------------------------------------------------------------------------
# tiled pass 2: recompute layers 1-3 + BN scale/shift + fc layers
# ----------------------------------------------------------------------------
def _fc_kernel(x_ref, w1_ref, b1_ref, w2_ref, b2_ref, w3_ref, b3_ref,
               scale_ref, shift_ref, w4_ref, b4_ref, w5_ref, b5_ref, out_ref):
    h = _cnn_stack(x_ref[...], w1_ref[...], b1_ref[...], w2_ref[...],
                   b2_ref[...], w3_ref[...], b3_ref[...])
    out = _fc_stack(h * scale_ref[...] + shift_ref[...], w4_ref[...],
                    b4_ref[...], w5_ref[...], b5_ref[...])
    out_ref[...] = out[:, :D_OUT_PAD]                  # narrow f32 store


# ----------------------------------------------------------------------------
# wrapper
# ----------------------------------------------------------------------------
def siamese_forward(x, params, *, tile_n=512, fuse_max_rows=FUSE_MAX_ROWS):
    """Forward pass of SiameseNetworkComplex.  x: (N, 21) float32."""
    (w1, b1, w2, b2, w3, b3, gamma, beta, w4, b4, w5, b5) = params
    n, f = x.shape
    if n == 0:
        return jnp.zeros((0, D_OUT), jnp.float32)

    # Host-side padding / bf16 casts (weights stay VMEM-resident across tiles).
    w1_p = jnp.zeros((F_PAD, D1), jnp.bfloat16).at[:f, :].set(w1.astype(jnp.bfloat16))
    w2_b = w2.astype(jnp.bfloat16)
    w3_b = w3.astype(jnp.bfloat16)
    w4_b = w4.astype(jnp.bfloat16)
    w5_p = jnp.zeros((D4, W5_LANES), jnp.bfloat16).at[:, :D_OUT].set(w5.astype(jnp.bfloat16))
    b5_p = jnp.zeros((1, W5_LANES), jnp.float32).at[:, :D_OUT].set(b5)

    def rep(shape):                                    # whole-array, block 0
        return pl.BlockSpec(shape, lambda i: (0,) * len(shape))

    # ---- fully fused single-launch path (no h3 traffic, one launch) --------
    if n <= fuse_max_rows:
        n_pad = max(8, ((n + 7) // 8) * 8)
        x_pad = jnp.zeros((n_pad, F_PAD), jnp.bfloat16).at[:n, :f].set(
            x.astype(jnp.bfloat16))
        out_pad = pl.pallas_call(
            functools.partial(_fused_kernel, n_valid=n),
            out_shape=jax.ShapeDtypeStruct((n_pad, D_OUT_PAD), jnp.float32),
            grid_spec=pltpu.PrefetchScalarGridSpec(
                num_scalar_prefetch=0, grid=(1,),
                in_specs=[rep(x_pad.shape), rep(w1_p.shape), rep(b1.shape),
                          rep(w2_b.shape), rep(b2.shape), rep(w3_b.shape),
                          rep(b3.shape), rep(gamma.shape), rep(beta.shape),
                          rep(w4_b.shape), rep(b4.shape), rep(w5_p.shape),
                          rep(b5_p.shape)],
                out_specs=pl.BlockSpec((n_pad, D_OUT_PAD), lambda i: (0, 0)),
            ),
            compiler_params=pltpu.CompilerParams(
                dimension_semantics=("arbitrary",),
                vmem_limit_bytes=VMEM_LIMIT),
        )(x_pad, w1_p, b1, w2_b, b2, w3_b, b3, gamma, beta, w4_b, b4, w5_p, b5_p)
        return out_pad[:n, :D_OUT]

    # ---- tiled two-pass recompute path (large batches) ----------------------
    num_tiles = -(-n // tile_n)
    n_pad = num_tiles * tile_n
    x_pad = jnp.zeros((n_pad, F_PAD), jnp.bfloat16).at[:n, :f].set(
        x.astype(jnp.bfloat16))

    cnn_specs = [rep(w1_p.shape), rep(b1.shape), rep(w2_b.shape),
                 rep(b2.shape), rep(w3_b.shape), rep(b3.shape)]

    # pass 1: BN partial statistics (parallel over batch tiles).
    p1_flops = 2 * n_pad * (F_PAD * D1 + D1 * D2 + D2 * D3)
    p1_bytes = (n_pad * F_PAD * 2
                + (F_PAD * D1 + D1 * D2 + D2 * D3) * 2 + (D1 + D2 + D3) * 4
                + 2 * num_tiles * 8 * D3 * 4)
    psum, psq = pl.pallas_call(
        functools.partial(_stats_kernel, n_valid=n, tile_n=tile_n),
        out_shape=(jax.ShapeDtypeStruct((num_tiles * 8, D3), jnp.float32),
                   jax.ShapeDtypeStruct((num_tiles * 8, D3), jnp.float32)),
        grid_spec=pltpu.PrefetchScalarGridSpec(
            num_scalar_prefetch=0, grid=(num_tiles,),
            in_specs=[pl.BlockSpec((tile_n, F_PAD), lambda i: (i, 0))] + cnn_specs,
            out_specs=[pl.BlockSpec((8, D3), lambda i: (i, 0)),
                       pl.BlockSpec((8, D3), lambda i: (i, 0))],
        ),
        compiler_params=pltpu.CompilerParams(
            dimension_semantics=("parallel",),
            vmem_limit_bytes=VMEM_LIMIT),
        cost_estimate=pl.CostEstimate(flops=p1_flops, transcendentals=0,
                                      bytes_accessed=p1_bytes),
    )(x_pad, w1_p, b1, w2_b, b2, w3_b, b3)

    # Tiny reduction + BN scale/shift folding (plain XLA; negligible work).
    inv_n = 1.0 / float(n)
    mean = jnp.sum(psum, axis=0, keepdims=True) * inv_n              # (1,256)
    var = jnp.maximum(jnp.sum(psq, axis=0, keepdims=True) * inv_n
                      - mean * mean, 0.0)                            # biased
    scale = gamma * lax.rsqrt(var + BN_EPS)
    shift = beta - mean * scale

    # pass 2: recompute layers 1-3 + BN + fc layers (parallel over tiles).
    p2_flops = 2 * n_pad * (F_PAD * D1 + D1 * D2 + D2 * D3 + D3 * D4
                            + D4 * W5_LANES)
    p2_bytes = (n_pad * F_PAD * 2 + n_pad * D_OUT_PAD * 4
                + (F_PAD * D1 + D1 * D2 + D2 * D3 + D3 * D4 + D4 * W5_LANES) * 2
                + (D1 + D2 + D3 + 2 * D3 + D4 + W5_LANES) * 4)
    out_pad = pl.pallas_call(
        _fc_kernel,
        out_shape=jax.ShapeDtypeStruct((n_pad, D_OUT_PAD), jnp.float32),
        grid_spec=pltpu.PrefetchScalarGridSpec(
            num_scalar_prefetch=0, grid=(num_tiles,),
            in_specs=([pl.BlockSpec((tile_n, F_PAD), lambda i: (i, 0))]
                      + cnn_specs
                      + [rep((1, D3)), rep((1, D3)), rep(w4_b.shape),
                         rep(b4.shape), rep(w5_p.shape), rep(b5_p.shape)]),
            out_specs=pl.BlockSpec((tile_n, D_OUT_PAD), lambda i: (i, 0)),
        ),
        compiler_params=pltpu.CompilerParams(
            dimension_semantics=("parallel",),
            vmem_limit_bytes=VMEM_LIMIT),
        cost_estimate=pl.CostEstimate(flops=p2_flops, transcendentals=0,
                                      bytes_accessed=p2_bytes),
    )(x_pad, w1_p, b1, w2_b, b2, w3_b, b3, scale, shift, w4_b, b4, w5_p, b5_p)

    return out_pad[:n, :D_OUT]


# ----------------------------------------------------------------------------
# pure-JAX reference (training-mode BN, dropout as identity) and params
# ----------------------------------------------------------------------------
def reference_forward(x, params):
    (w1, b1, w2, b2, w3, b3, gamma, beta, w4, b4, w5, b5) = params
    h = jax.nn.relu(x @ w1 + b1)
    h = jax.nn.relu(h @ w2 + b2)
    h = jax.nn.relu(h @ w3 + b3)
    mean = jnp.mean(h, axis=0, keepdims=True)
    var = jnp.mean((h - mean) ** 2, axis=0, keepdims=True)   # biased
    h = (h - mean) / jnp.sqrt(var + BN_EPS) * gamma + beta
    h = jax.nn.relu(h @ w4 + b4)
    return h @ w5 + b5


def init_params(key):
    """Deterministic synthetic parameters (weights (in,out), biases (1,out))."""
    dims = [(F_IN, D1), (D1, D2), (D2, D3), (D3, D4), (D4, D_OUT)]
    keys = jax.random.split(key, len(dims) * 2)
    ws, bs = [], []
    for i, (din, dout) in enumerate(dims):
        scale = 1.0 / jnp.sqrt(jnp.float32(din))
        ws.append(jax.random.uniform(keys[2 * i], (din, dout), jnp.float32,
                                     minval=-scale, maxval=scale))
        bs.append(jax.random.uniform(keys[2 * i + 1], (1, dout), jnp.float32,
                                     minval=-scale, maxval=scale))
    gamma = jnp.ones((1, D3), jnp.float32)   # BatchNorm1d weight init
    beta = jnp.zeros((1, D3), jnp.float32)   # BatchNorm1d bias init
    return (ws[0], bs[0], ws[1], bs[1], ws[2], bs[2],
            gamma, beta, ws[3], bs[3], ws[4], bs[4])


if __name__ == "__main__":
    key = jax.random.PRNGKey(0)
    k_x, k_x2, k_p = jax.random.split(key, 3)
    params = init_params(k_p)

    # Small batch -> fully fused single pallas_call path.
    x_small = jax.random.normal(k_x, (8, F_IN), jnp.float32)
    out_small = siamese_forward(x_small, params)
    jax.block_until_ready(out_small)
    assert out_small.shape == (8, D_OUT), out_small.shape
    assert bool(jnp.all(jnp.isfinite(out_small)))
    ref_small = reference_forward(x_small, params)
    assert float(jnp.max(jnp.abs(out_small - ref_small))) < 0.2

    # Larger, non-tile-multiple batch -> tiled two-pass recompute path.
    x_big = jax.random.normal(k_x2, (1300, F_IN), jnp.float32)
    out_big = siamese_forward(x_big, params, tile_n=512, fuse_max_rows=0)
    jax.block_until_ready(out_big)
    assert out_big.shape == (1300, D_OUT), out_big.shape
    assert bool(jnp.all(jnp.isfinite(out_big)))
    ref_big = reference_forward(x_big, params)
    assert float(jnp.max(jnp.abs(out_big - ref_big))) < 0.2

    print("KERNEL_OK")
</pallas_src>

<mosaic_0001>
module attributes {stable_mosaic.version = 11 : i64} {
  func.func @_fused_kernel(%arg0: i32, %arg1: memref<8x32xbf16, #tpu.memory_space<vmem>>, %arg2: memref<32x64xbf16, #tpu.memory_space<vmem>>, %arg3: memref<1x64xf32, #tpu.memory_space<vmem>>, %arg4: memref<64x128xbf16, #tpu.memory_space<vmem>>, %arg5: memref<1x128xf32, #tpu.memory_space<vmem>>, %arg6: memref<128x256xbf16, #tpu.memory_space<vmem>>, %arg7: memref<1x256xf32, #tpu.memory_space<vmem>>, %arg8: memref<1x256xf32, #tpu.memory_space<vmem>>, %arg9: memref<1x256xf32, #tpu.memory_space<vmem>>, %arg10: memref<256x128xbf16, #tpu.memory_space<vmem>>, %arg11: memref<1x128xf32, #tpu.memory_space<vmem>>, %arg12: memref<128x128xbf16, #tpu.memory_space<vmem>>, %arg13: memref<1x128xf32, #tpu.memory_space<vmem>>, %arg14: memref<8x8xf32, #tpu.memory_space<vmem>>) attributes {dimension_semantics = [#tpu.dimension_semantics<arbitrary>], iteration_bounds = array<i64: 1>, scalar_prefetch = 0 : i64, scratch_operands = 0 : i64, tpu.core_type = #tpu.core_type<tc>, window_params = [{pipeline_mode = #tpu.pipeline_mode<synchronous>, transform_indices = @transform_0, window_bounds = array<i64: 8, 32>}, {pipeline_mode = #tpu.pipeline_mode<synchronous>, transform_indices = @transform_1, window_bounds = array<i64: 32, 64>}, {pipeline_mode = #tpu.pipeline_mode<synchronous>, transform_indices = @transform_2, window_bounds = array<i64: 1, 64>}, {pipeline_mode = #tpu.pipeline_mode<synchronous>, transform_indices = @transform_3, window_bounds = array<i64: 64, 128>}, {pipeline_mode = #tpu.pipeline_mode<synchronous>, transform_indices = @transform_4, window_bounds = array<i64: 1, 128>}, {pipeline_mode = #tpu.pipeline_mode<synchronous>, transform_indices = @transform_5, window_bounds = array<i64: 128, 256>}, {pipeline_mode = #tpu.pipeline_mode<synchronous>, transform_indices = @transform_6, window_bounds = array<i64: 1, 256>}, {pipeline_mode = #tpu.pipeline_mode<synchronous>, transform_indices = @transform_7, window_bounds = array<i64: 1, 256>}, {pipeline_mode = #tpu.pipeline_mode<synchronous>, transform_indices = @transform_8, window_bounds = array<i64: 1, 256>}, {pipeline_mode = #tpu.pipeline_mode<synchronous>, transform_indices = @transform_9, window_bounds = array<i64: 256, 128>}, {pipeline_mode = #tpu.pipeline_mode<synchronous>, transform_indices = @transform_10, window_bounds = array<i64: 1, 128>}, {pipeline_mode = #tpu.pipeline_mode<synchronous>, transform_indices = @transform_11, window_bounds = array<i64: 128, 128>}, {pipeline_mode = #tpu.pipeline_mode<synchronous>, transform_indices = @transform_12, window_bounds = array<i64: 1, 128>}, {pipeline_mode = #tpu.pipeline_mode<synchronous>, transform_indices = @transform_13, window_bounds = array<i64: 8, 8>}]} {
    %c0 = arith.constant 0 : index
    %c0_0 = arith.constant 0 : index
    %0 = vector.load %arg1[%c0, %c0_0] : memref<8x32xbf16, #tpu.memory_space<vmem>>, vector<8x32xbf16>
    %c0_1 = arith.constant 0 : index
    %c0_2 = arith.constant 0 : index
    %1 = vector.load %arg2[%c0_1, %c0_2] : memref<32x64xbf16, #tpu.memory_space<vmem>>, vector<32x64xbf16>
    %c0_3 = arith.constant 0 : index
    %c0_4 = arith.constant 0 : index
    %2 = vector.load %arg3[%c0_3, %c0_4] : memref<1x64xf32, #tpu.memory_space<vmem>>, vector<1x64xf32>
    %c0_5 = arith.constant 0 : index
    %c0_6 = arith.constant 0 : index
    %3 = vector.load %arg4[%c0_5, %c0_6] : memref<64x128xbf16, #tpu.memory_space<vmem>>, vector<64x128xbf16>
    %c0_7 = arith.constant 0 : index
    %c0_8 = arith.constant 0 : index
    %4 = vector.load %arg5[%c0_7, %c0_8] : memref<1x128xf32, #tpu.memory_space<vmem>>, vector<1x128xf32>
    %c0_9 = arith.constant 0 : index
    %c0_10 = arith.constant 0 : index
    %5 = vector.load %arg6[%c0_9, %c0_10] : memref<128x256xbf16, #tpu.memory_space<vmem>>, vector<128x256xbf16>
    %c0_11 = arith.constant 0 : index
    %c0_12 = arith.constant 0 : index
    %6 = vector.load %arg7[%c0_11, %c0_12] : memref<1x256xf32, #tpu.memory_space<vmem>>, vector<1x256xf32>
    %cst = arith.constant dense<0.000000e+00> : vector<8x64xf32>
    %7 = tpu.matmul %0, %1, %cst {dimension_numbers = #tpu.dot_dimension_numbers<[1], [0], [0], [1], [0, 0, 1, 1], [], []>} : vector<8x32xbf16>, vector<32x64xbf16>, vector<8x64xf32> -> vector<8x64xf32>
    %8 = vector.broadcast %2 : vector<1x64xf32> to vector<8x64xf32>
    %9 = arith.addf %7, %8 : vector<8x64xf32>
    %cst_13 = arith.constant 0.000000e+00 : f32
    %10 = vector.broadcast %cst_13 : f32 to vector<8x64xf32>
    %11 = arith.maximumf %9, %10 : vector<8x64xf32>
    %12 = arith.truncf %11 : vector<8x64xf32> to vector<8x64xbf16>
    %cst_14 = arith.constant dense<0.000000e+00> : vector<8x128xf32>
    %13 = tpu.matmul %12, %3, %cst_14 {dimension_numbers = #tpu.dot_dimension_numbers<[1], [0], [0], [1], [0, 0, 1, 1], [], []>} : vector<8x64xbf16>, vector<64x128xbf16>, vector<8x128xf32> -> vector<8x128xf32>
    %14 = vector.broadcast %4 : vector<1x128xf32> to vector<8x128xf32>
    %15 = arith.addf %13, %14 : vector<8x128xf32>
    %cst_15 = arith.constant 0.000000e+00 : f32
    %16 = vector.broadcast %cst_15 : f32 to vector<8x128xf32>
    %17 = arith.maximumf %15, %16 : vector<8x128xf32>
    %18 = arith.truncf %17 : vector<8x128xf32> to vector<8x128xbf16>
    %cst_16 = arith.constant dense<0.000000e+00> : vector<8x256xf32>
    %19 = tpu.matmul %18, %5, %cst_16 {dimension_numbers = #tpu.dot_dimension_numbers<[1], [0], [0], [1], [0, 0, 1, 1], [], []>} : vector<8x128xbf16>, vector<128x256xbf16>, vector<8x256xf32> -> vector<8x256xf32>
    %20 = vector.broadcast %6 : vector<1x256xf32> to vector<8x256xf32>
    %21 = arith.addf %19, %20 : vector<8x256xf32>
    %cst_17 = arith.constant 0.000000e+00 : f32
    %22 = vector.broadcast %cst_17 : f32 to vector<8x256xf32>
    %23 = arith.maximumf %21, %22 : vector<8x256xf32>
    %24 = tpu.iota {dimensions = array<i32: 0>} : vector<8x1xi32>
    %c8_i32 = arith.constant 8 : i32
    %25 = vector.broadcast %c8_i32 : i32 to vector<8x1xi32>
    %26 = arith.cmpi slt, %24, %25 : vector<8x1xi32>
    %27 = arith.extui %26 : vector<8x1xi1> to vector<8x1xi32>
    %28 = arith.sitofp %27 : vector<8x1xi32> to vector<8x1xf32>
    %29 = vector.broadcast %28 : vector<8x1xf32> to vector<8x256xf32>
    %30 = arith.mulf %23, %29 : vector<8x256xf32>
    %cst_18 = arith.constant dense<0.000000e+00> : vector<256xf32>
    %31 = vector.multi_reduction <add>, %30, %cst_18 [0] : vector<8x256xf32> to vector<256xf32>
    %32 = vector.shape_cast %31 : vector<256xf32> to vector<1x256xf32>
    %cst_19 = arith.constant 1.250000e-01 : f32
    %33 = vector.broadcast %cst_19 : f32 to vector<1x256xf32>
    %34 = arith.mulf %32, %33 : vector<1x256xf32>
    %35 = arith.mulf %30, %30 : vector<8x256xf32>
    %cst_20 = arith.constant dense<0.000000e+00> : vector<256xf32>
    %36 = vector.multi_reduction <add>, %35, %cst_20 [0] : vector<8x256xf32> to vector<256xf32>
    %37 = vector.shape_cast %36 : vector<256xf32> to vector<1x256xf32>
    %cst_21 = arith.constant 1.250000e-01 : f32
    %38 = vector.broadcast %cst_21 : f32 to vector<1x256xf32>
    %39 = arith.mulf %37, %38 : vector<1x256xf32>
    %40 = arith.mulf %34, %34 : vector<1x256xf32>
    %41 = arith.subf %39, %40 : vector<1x256xf32>
    %cst_22 = arith.constant 0.000000e+00 : f32
    %42 = vector.broadcast %cst_22 : f32 to vector<1x256xf32>
    %43 = arith.maximumf %41, %42 : vector<1x256xf32>
    %c0_23 = arith.constant 0 : index
    %c0_24 = arith.constant 0 : index
    %44 = vector.load %arg8[%c0_23, %c0_24] : memref<1x256xf32, #tpu.memory_space<vmem>>, vector<1x256xf32>
    %cst_25 = arith.constant 9.99999974E-6 : f32
    %45 = vector.broadcast %cst_25 : f32 to vector<1x256xf32>
    %46 = arith.addf %43, %45 : vector<1x256xf32>
    %47 = math.rsqrt %46 : vector<1x256xf32>
    %48 = arith.mulf %44, %47 : vector<1x256xf32>
    %c0_26 = arith.constant 0 : index
    %c0_27 = arith.constant 0 : index
    %49 = vector.load %arg9[%c0_26, %c0_27] : memref<1x256xf32, #tpu.memory_space<vmem>>, vector<1x256xf32>
    %50 = arith.mulf %34, %48 : vector<1x256xf32>
    %51 = arith.subf %49, %50 : vector<1x256xf32>
    %52 = vector.broadcast %48 : vector<1x256xf32> to vector<8x256xf32>
    %53 = arith.mulf %23, %52 : vector<8x256xf32>
    %54 = vector.broadcast %51 : vector<1x256xf32> to vector<8x256xf32>
    %55 = arith.addf %53, %54 : vector<8x256xf32>
    %c0_28 = arith.constant 0 : index
    %c0_29 = arith.constant 0 : index
    %56 = vector.load %arg10[%c0_28, %c0_29] : memref<256x128xbf16, #tpu.memory_space<vmem>>, vector<256x128xbf16>
    %c0_30 = arith.constant 0 : index
    %c0_31 = arith.constant 0 : index
    %57 = vector.load %arg11[%c0_30, %c0_31] : memref<1x128xf32, #tpu.memory_space<vmem>>, vector<1x128xf32>
    %c0_32 = arith.constant 0 : index
    %c0_33 = arith.constant 0 : index
    %58 = vector.load %arg12[%c0_32, %c0_33] : memref<128x128xbf16, #tpu.memory_space<vmem>>, vector<128x128xbf16>
    %c0_34 = arith.constant 0 : index
    %c0_35 = arith.constant 0 : index
    %59 = vector.load %arg13[%c0_34, %c0_35] : memref<1x128xf32, #tpu.memory_space<vmem>>, vector<1x128xf32>
    %60 = arith.truncf %55 : vector<8x256xf32> to vector<8x256xbf16>
    %cst_36 = arith.constant dense<0.000000e+00> : vector<8x128xf32>
    %61 = tpu.matmul %60, %56, %cst_36 {dimension_numbers = #tpu.dot_dimension_numbers<[1], [0], [0], [1], [0, 0, 1, 1], [], []>} : vector<8x256xbf16>, vector<256x128xbf16>, vector<8x128xf32> -> vector<8x128xf32>
    %62 = vector.broadcast %57 : vector<1x128xf32> to vector<8x128xf32>
    %63 = arith.addf %61, %62 : vector<8x128xf32>
    %cst_37 = arith.constant 0.000000e+00 : f32
    %64 = vector.broadcast %cst_37 : f32 to vector<8x128xf32>
    %65 = arith.maximumf %63, %64 : vector<8x128xf32>
    %66 = arith.truncf %65 : vector<8x128xf32> to vector<8x128xbf16>
    %cst_38 = arith.constant dense<0.000000e+00> : vector<8x128xf32>
    %67 = tpu.matmul %66, %58, %cst_38 {dimension_numbers = #tpu.dot_dimension_numbers<[1], [0], [0], [1], [0, 0, 1, 1], [], []>} : vector<8x128xbf16>, vector<128x128xbf16>, vector<8x128xf32> -> vector<8x128xf32>
    %68 = vector.broadcast %59 : vector<1x128xf32> to vector<8x128xf32>
    %69 = arith.addf %67, %68 : vector<8x128xf32>
    %70 = vector.extract_strided_slice %69 {offsets = [0, 0], sizes = [8, 8], strides = [1, 1]} : vector<8x128xf32> to vector<8x8xf32>
    %c0_39 = arith.constant 0 : index
    %c0_40 = arith.constant 0 : index
    %71 = vector.load %arg14[%c0_39, %c0_40] : memref<8x8xf32, #tpu.memory_space<vmem>>, vector<8x8xf32>
    tpu.vector_store %arg14[%c0_39, %c0_40], %70 {strides = array<i32>} : memref<8x8xf32, #tpu.memory_space<vmem>>, vector<8x8xf32>,
    return
  }
  func.func @transform_0(%arg0: i32) -> (i32, i32) {
    %c0_i32 = arith.constant 0 : i32
    %c0_i32_0 = arith.constant 0 : i32
    %c0_i32_1 = arith.constant 0 : i32
    return %c0_i32, %c0_i32_0 : i32, i32
  }
  func.func @transform_1(%arg0: i32) -> (i32, i32) {
    %c0_i32 = arith.constant 0 : i32
    %c0_i32_0 = arith.constant 0 : i32
    %c0_i32_1 = arith.constant 0 : i32
    return %c0_i32, %c0_i32_0 : i32, i32
  }
  func.func @transform_2(%arg0: i32) -> (i32, i32) {
    %c0_i32 = arith.constant 0 : i32
    %c0_i32_0 = arith.constant 0 : i32
    %c0_i32_1 = arith.constant 0 : i32
    return %c0_i32, %c0_i32_0 : i32, i32
  }
  func.func @transform_3(%arg0: i32) -> (i32, i32) {
    %c0_i32 = arith.constant 0 : i32
    %c0_i32_0 = arith.constant 0 : i32
    %c0_i32_1 = arith.constant 0 : i32
    return %c0_i32, %c0_i32_0 : i32, i32
  }
  func.func @transform_4(%arg0: i32) -> (i32, i32) {
    %c0_i32 = arith.constant 0 : i32
    %c0_i32_0 = arith.constant 0 : i32
    %c0_i32_1 = arith.constant 0 : i32
    return %c0_i32, %c0_i32_0 : i32, i32
  }
  func.func @transform_5(%arg0: i32) -> (i32, i32) {
    %c0_i32 = arith.constant 0 : i32
    %c0_i32_0 = arith.constant 0 : i32
    %c0_i32_1 = arith.constant 0 : i32
    return %c0_i32, %c0_i32_0 : i32, i32
  }
  func.func @transform_6(%arg0: i32) -> (i32, i32) {
    %c0_i32 = arith.constant 0 : i32
    %c0_i32_0 = arith.constant 0 : i32
    %c0_i32_1 = arith.constant 0 : i32
    return %c0_i32, %c0_i32_0 : i32, i32
  }
  func.func @transform_7(%arg0: i32) -> (i32, i32) {
    %c0_i32 = arith.constant 0 : i32
    %c0_i32_0 = arith.constant 0 : i32
    %c0_i32_1 = arith.constant 0 : i32
    return %c0_i32, %c0_i32_0 : i32, i32
  }
  func.func @transform_8(%arg0: i32) -> (i32, i32) {
    %c0_i32 = arith.constant 0 : i32
    %c0_i32_0 = arith.constant 0 : i32
    %c0_i32_1 = arith.constant 0 : i32
    return %c0_i32, %c0_i32_0 : i32, i32
  }
  func.func @transform_9(%arg0: i32) -> (i32, i32) {
    %c0_i32 = arith.constant 0 : i32
    %c0_i32_0 = arith.constant 0 : i32
    %c0_i32_1 = arith.constant 0 : i32
    return %c0_i32, %c0_i32_0 : i32, i32
  }
  func.func @transform_10(%arg0: i32) -> (i32, i32) {
    %c0_i32 = arith.constant 0 : i32
    %c0_i32_0 = arith.constant 0 : i32
    %c0_i32_1 = arith.constant 0 : i32
    return %c0_i32, %c0_i32_0 : i32, i32
  }
  func.func @transform_11(%arg0: i32) -> (i32, i32) {
    %c0_i32 = arith.constant 0 : i32
    %c0_i32_0 = arith.constant 0 : i32
    %c0_i32_1 = arith.constant 0 : i32
    return %c0_i32, %c0_i32_0 : i32, i32
  }
  func.func @transform_12(%arg0: i32) -> (i32, i32) {
    %c0_i32 = arith.constant 0 : i32
    %c0_i32_0 = arith.constant 0 : i32
    %c0_i32_1 = arith.constant 0 : i32
    return %c0_i32, %c0_i32_0 : i32, i32
  }
  func.func @transform_13(%arg0: i32) -> (i32, i32) {
    %c0_i32 = arith.constant 0 : i32
    %c0_i32_0 = arith.constant 0 : i32
    %c0_i32_1 = arith.constant 0 : i32
    return %c0_i32, %c0_i32_0 : i32, i32
  }
}

</mosaic_0001>

<llo_original>
// kernel: tpu_custom_call.1
$region0: #{tpu_custom_call.1}
  #allocation0 [shape = 'u32[]', space=smem, size = 0x4, offset = 0x4, fixed_abs, tag = 'smem constant byte address 0x4 - core index']
  #allocation1 [shape = 'u32[144,128]{1,0:T(1,128)}', space=vmem, size = 0x12000, scoped, tag = 'internal scratch']
  %s0 = inlined_call_operand.hbm [shape: bf16[8,32], index: 0, kind: input, shape index: {}]
  %s1 = inlined_call_operand.hbm [shape: bf16[32,64], index: 1, kind: input, shape index: {}]
  %s2 = inlined_call_operand.vmem [shape: f32[1,64], index: 2, kind: input, shape index: {}]
  %s3 = inlined_call_operand.hbm [shape: bf16[64,128], index: 3, kind: input, shape index: {}]
  %s4 = inlined_call_operand.vmem [shape: f32[1,128], index: 4, kind: input, shape index: {}]
  %s5 = inlined_call_operand.hbm [shape: bf16[128,256], index: 5, kind: input, shape index: {}]
  %s6 = inlined_call_operand.vmem [shape: f32[1,256], index: 6, kind: input, shape index: {}]
  %s7 = inlined_call_operand.vmem [shape: f32[1,256], index: 7, kind: input, shape index: {}]
  %s8 = inlined_call_operand.vmem [shape: f32[1,256], index: 8, kind: input, shape index: {}]
  %s9 = inlined_call_operand.hbm [shape: bf16[256,128], index: 9, kind: input, shape index: {}]
  %s10 = inlined_call_operand.vmem [shape: f32[1,128], index: 10, kind: input, shape index: {}]
  %s11 = inlined_call_operand.hbm [shape: bf16[128,128], index: 11, kind: input, shape index: {}]
  %s12 = inlined_call_operand.vmem [shape: f32[1,128], index: 12, kind: input, shape index: {}]
  %s13 = inlined_call_operand.hbm [shape: f32[8,8], index: 13, kind: output, shape index: {}]
  %s14 = sld [smem:[#allocation0]]
  $region86: #{tpu_custom_call.1} parent=0
    _
  %s16 = ssub.s32 1, %s14
  %s17 = scalar_select 0, %s16, %s14
  $region1: #{tpu_custom_call.1} parent=0
    #allocation2 [shape = 'u8[2048]{0}', space=vmem, size = 0x800, scoped, tag = 'input window, operand 0, single buffered']
    #allocation3 [shape = 's32[1]{0}', space=sflag, size = 0x4, scoped, tag = 'scoped memory for tpu_custom_call.1']
    #allocation4 [shape = 's32[1]{0}', space=sflag, size = 0x4, scoped, tag = 'scoped memory for tpu_custom_call.1']
    #allocation5 [shape = 'u8[8192]{0}', space=vmem, size = 0x2000, scoped, tag = 'input window, operand 1, single buffered']
    #allocation6 [shape = 's32[1]{0}', space=sflag, size = 0x4, scoped, tag = 'scoped memory for tpu_custom_call.1']
    #allocation7 [shape = 'u8[16384]{0}', space=vmem, size = 0x4000, scoped, tag = 'input window, operand 3, single buffered']
    #allocation8 [shape = 'u8[65536]{0}', space=vmem, size = 0x10000, scoped, tag = 'input window, operand 5, single buffered']
    #allocation9 [shape = 's32[1]{0}', space=sflag, size = 0x4, scoped, tag = 'scoped memory for tpu_custom_call.1']
    #allocation10 [shape = 'u8[65536]{0}', space=vmem, size = 0x10000, scoped, tag = 'input window, operand 9, single buffered']
    #allocation11 [shape = 'u8[32768]{0}', space=vmem, size = 0x8000, scoped, tag = 'input window, operand 11, single buffered']
    #allocation12 [shape = 's32[1]{0}', space=sflag, size = 0x4, scoped, tag = 'scoped memory for tpu_custom_call.1']
    #allocation13 [shape = 'u8[4096]{0}', space=vmem, size = 0x1000, scoped, tag = 'output window, operand 0, single buffered']
    %18 = vsyncpa [#allocation3], 0
    %19 = vsyncpa [#allocation6], 0
    %20 = vsyncpa [#allocation9], 0
    %21 = vsyncpa [#allocation12], 0
    %22 = vsyncpa [#allocation4], 0
    // Predicated region
    $region2: #{tpu_custom_call.1} parent=1 // pred_check
      _
    $region3: #{tpu_custom_call.1} parent=1 // pred_check_branch
      %24 = sbr.rel (0) target = $region5
    $region4: #{tpu_custom_call.1} parent=1 // pred_region
      %s26 = ssub.s32 64, 64
      %27 = vsyncadd [#allocation3], %s26
      %s29 = sshll.u32 [#allocation2], 4
      %s30 = int_to_ptr.vmem [resolvable:$true] %s29
      %32 = dma.hbm_to_vmem [thread:$0]  %s0, 64, %s30, [#allocation3]
    $region5: #{tpu_custom_call.1} parent=1 // pred_fallthru
      _
    // Predicated region
    $region6: #{tpu_custom_call.1} parent=1 // pred_check
      _
    $region7: #{tpu_custom_call.1} parent=1 // pred_check_branch
      %34 = sbr.rel (0) target = $region9
    $region8: #{tpu_custom_call.1} parent=1 // pred_region
      %s36 = ssub.s32 256, 256
      %37 = vsyncadd [#allocation6], %s36
      %s38 = sshll.u32 [#allocation5], 4
      %s39 = int_to_ptr.vmem [resolvable:$true] %s38
      %44 = dma.hbm_to_vmem [thread:$0]  %s1, 256, %s39, [#allocation6], 64, 64, 4
    $region9: #{tpu_custom_call.1} parent=1 // pred_fallthru
      _
    // Predicated region
    $region10: #{tpu_custom_call.1} parent=1 // pred_check
      _
    $region11: #{tpu_custom_call.1} parent=1 // pred_check_branch
      %46 = sbr.rel (0) target = $region13
    $region12: #{tpu_custom_call.1} parent=1 // pred_region
      _
    $region13: #{tpu_custom_call.1} parent=1 // pred_fallthru
      _
    // Predicated region
    $region14: #{tpu_custom_call.1} parent=1 // pred_check
      _
    $region15: #{tpu_custom_call.1} parent=1 // pred_check_branch
      %48 = sbr.rel (0) target = $region17
    $region16: #{tpu_custom_call.1} parent=1 // pred_region
      %s50 = ssub.s32 512, 512
      %51 = vsyncadd [#allocation6], %s50
      %s52 = sshll.u32 [#allocation7], 4
      %s53 = int_to_ptr.vmem [resolvable:$true] %s52
      %58 = dma.hbm_to_vmem [thread:$0]  %s3, 512, %s53, [#allocation6], 64, 64, 4
    $region17: #{tpu_custom_call.1} parent=1 // pred_fallthru
      _
    // Predicated region
    $region18: #{tpu_custom_call.1} parent=1 // pred_check
      _
    $region19: #{tpu_custom_call.1} parent=1 // pred_check_branch
      %60 = sbr.rel (0) target = $region21
    $region20: #{tpu_custom_call.1} parent=1 // pred_region
      _
    $region21: #{tpu_custom_call.1} parent=1 // pred_fallthru
      _
    // Predicated region
    $region22: #{tpu_custom_call.1} parent=1 // pred_check
      _
    $region23: #{tpu_custom_call.1} parent=1 // pred_check_branch
      %62 = sbr.rel (0) target = $region25
    $region24: #{tpu_custom_call.1} parent=1 // pred_region
      %s64 = ssub.s32 2048, 2048
      %65 = vsyncadd [#allocation9], %s64
      %s66 = sshll.u32 [#allocation8], 4
      %s67 = int_to_ptr.vmem [resolvable:$true] %s66
      %72 = dma.hbm_to_vmem [thread:$0]  %s5, 2048, %s67, [#allocation9], 128, 128, 8
    $region25: #{tpu_custom_call.1} parent=1 // pred_fallthru
      _
    // Predicated region
    $region26: #{tpu_custom_call.1} parent=1 // pred_check
      _
    $region27: #{tpu_custom_call.1} parent=1 // pred_check_branch
      %74 = sbr.rel (0) target = $region29
    $region28: #{tpu_custom_call.1} parent=1 // pred_region
      _
    $region29: #{tpu_custom_call.1} parent=1 // pred_fallthru
      _
    // Predicated region
    $region30: #{tpu_custom_call.1} parent=1 // pred_check
      _
    $region31: #{tpu_custom_call.1} parent=1 // pred_check_branch
      %76 = sbr.rel (0) target = $region33
    $region32: #{tpu_custom_call.1} parent=1 // pred_region
      _
    $region33: #{tpu_custom_call.1} parent=1 // pred_fallthru
      _
    // Predicated region
    $region34: #{tpu_custom_call.1} parent=1 // pred_check
      _
    $region35: #{tpu_custom_call.1} parent=1 // pred_check_branch
      %78 = sbr.rel (0) target = $region37
    $region36: #{tpu_custom_call.1} parent=1 // pred_region
      _
    $region37: #{tpu_custom_call.1} parent=1 // pred_fallthru
      _
    // Predicated region
    $region38: #{tpu_custom_call.1} parent=1 // pred_check
      _
    $region39: #{tpu_custom_call.1} parent=1 // pred_check_branch
      %80 = sbr.rel (0) target = $region41
    $region40: #{tpu_custom_call.1} parent=1 // pred_region
      %s82 = ssub.s32 2048, 2048
      %83 = vsyncadd [#allocation9], %s82
      %s84 = sshll.u32 [#allocation10], 4
      %s85 = int_to_ptr.vmem [resolvable:$true] %s84
      %90 = dma.hbm_to_vmem [thread:$0]  %s9, 2048, %s85, [#allocation9], 64, 64, 4
    $region41: #{tpu_custom_call.1} parent=1 // pred_fallthru
      _
    // Predicated region
    $region42: #{tpu_custom_call.1} parent=1 // pred_check
      _
    $region43: #{tpu_custom_call.1} parent=1 // pred_check_branch
      %92 = sbr.rel (0) target = $region45
    $region44: #{tpu_custom_call.1} parent=1 // pred_region
      _
    $region45: #{tpu_custom_call.1} parent=1 // pred_fallthru
      _
    // Predicated region
    $region46: #{tpu_custom_call.1} parent=1 // pred_check
      _
    $region47: #{tpu_custom_call.1} parent=1 // pred_check_branch
      %94 = sbr.rel (0) target = $region49
    $region48: #{tpu_custom_call.1} parent=1 // pred_region
      %s96 = ssub.s32 1024, 1024
      %97 = vsyncadd [#allocation12], %s96
      %s98 = sshll.u32 [#allocation11], 4
      %s99 = int_to_ptr.vmem [resolvable:$true] %s98
      %104 = dma.hbm_to_vmem [thread:$0]  %s11, 1024, %s99, [#allocation12], 64, 64, 4
    $region49: #{tpu_custom_call.1} parent=1 // pred_fallthru
      _
    // Predicated region
    $region50: #{tpu_custom_call.1} parent=1 // pred_check
      _
    $region51: #{tpu_custom_call.1} parent=1 // pred_check_branch
      %106 = sbr.rel (0) target = $region53
    $region52: #{tpu_custom_call.1} parent=1 // pred_region
      _
    $region53: #{tpu_custom_call.1} parent=1 // pred_fallthru
      _
    // Predicated region
    $region54: #{tpu_custom_call.1} parent=1 // pred_check
      _
    $region55: #{tpu_custom_call.1} parent=1 // pred_check_branch
      %108 = sbr.rel (0) target = $region57
    $region56: #{tpu_custom_call.1} parent=1 // pred_region
      %109 = dma.done [#allocation3], 64
    $region57: #{tpu_custom_call.1} parent=1 // pred_fallthru
      _
    // Predicated region
    $region58: #{tpu_custom_call.1} parent=1 // pred_check
      _
    $region59: #{tpu_custom_call.1} parent=1 // pred_check_branch
      %111 = sbr.rel (0) target = $region61
    $region60: #{tpu_custom_call.1} parent=1 // pred_region
      %112 = dma.done [#allocation6], 256
    $region61: #{tpu_custom_call.1} parent=1 // pred_fallthru
      _
    // Predicated region
    $region62: #{tpu_custom_call.1} parent=1 // pred_check
      _
    $region63: #{tpu_custom_call.1} parent=1 // pred_check_branch
      %114 = sbr.rel (0) target = $region65
    $region64: #{tpu_custom_call.1} parent=1 // pred_region
      %115 = dma.done [#allocation6], 512
    $region65: #{tpu_custom_call.1} parent=1 // pred_fallthru
      _
    // Predicated region
    $region66: #{tpu_custom_call.1} parent=1 // pred_check
      _
    $region67: #{tpu_custom_call.1} parent=1 // pred_check_branch
      %117 = sbr.rel (0) target = $region69
    $region68: #{tpu_custom_call.1} parent=1 // pred_region
      %118 = dma.done [#allocation9], 2048
    $region69: #{tpu_custom_call.1} parent=1 // pred_fallthru
      _
    // Predicated region
    $region70: #{tpu_custom_call.1} parent=1 // pred_check
      _
    $region71: #{tpu_custom_call.1} parent=1 // pred_check_branch
      %120 = sbr.rel (0) target = $region73
    $region72: #{tpu_custom_call.1} parent=1 // pred_region
      %121 = dma.done [#allocation9], 2048
    $region73: #{tpu_custom_call.1} parent=1 // pred_fallthru
      _
    // Predicated region
    $region74: #{tpu_custom_call.1} parent=1 // pred_check
      _
    $region75: #{tpu_custom_call.1} parent=1 // pred_check_branch
      %123 = sbr.rel (0) target = $region77
    $region76: #{tpu_custom_call.1} parent=1 // pred_region
      %124 = dma.done [#allocation12], 1024
    $region77: #{tpu_custom_call.1} parent=1 // pred_fallthru
      _
    %v126 = vld [vmem:[#allocation2] sm:$0xf]
    %v127 = vld [vmem:[#allocation5] sm:$0xf]
    %v128 = vld [vmem:[#allocation5 + $0x4] sm:$0xf]
    %v129 = vld [vmem:[#allocation5 + $0x8] sm:$0xf]
    %v130 = vld [vmem:[#allocation5 + $0xc] sm:$0xf]
    %v131 = vld [vmem:[%s2] sm:$0x1]
    %v132 = vld [vmem:[#allocation7] sm:$0xf]
    %v133 = vld [vmem:[#allocation7 + $0x4] sm:$0xf]
    %v134 = vld [vmem:[#allocation7 + $0x8] sm:$0xf]
    %v135 = vld [vmem:[#allocation7 + $0xc] sm:$0xf]
    %v136 = vld [vmem:[#allocation7 + $0x10] sm:$0xf]
    %v137 = vld [vmem:[#allocation7 + $0x14] sm:$0xf]
    %v138 = vld [vmem:[#allocation7 + $0x18] sm:$0xf]
    %v139 = vld [vmem:[#allocation7 + $0x1c] sm:$0xf]
    %v140 = vld [vmem:[%s4] sm:$0x1]
    %v141 = vld [vmem:[#allocation8] sm:$0xff]
    %v142 = vld [vmem:[#allocation8 + $0x8] sm:$0xff]
    %v143 = vld [vmem:[#allocation8 + $0x10] sm:$0xff]
    %v144 = vld [vmem:[#allocation8 + $0x18] sm:$0xff]
    %v145 = vld [vmem:[#allocation8 + $0x20] sm:$0xff]
    %v146 = vld [vmem:[#allocation8 + $0x28] sm:$0xff]
    %v147 = vld [vmem:[#allocation8 + $0x30] sm:$0xff]
    %v148 = vld [vmem:[#allocation8 + $0x38] sm:$0xff]
    %v149 = vld [vmem:[#allocation8 + $0x40] sm:$0xff]
    %v150 = vld [vmem:[#allocation8 + $0x48] sm:$0xff]
    %v151 = vld [vmem:[#allocation8 + $0x50] sm:$0xff]
    %v152 = vld [vmem:[#allocation8 + $0x58] sm:$0xff]
    %v153 = vld [vmem:[#allocation8 + $0x60] sm:$0xff]
    %v154 = vld [vmem:[#allocation8 + $0x68] sm:$0xff]
    %v155 = vld [vmem:[#allocation8 + $0x70] sm:$0xff]
    %v156 = vld [vmem:[#allocation8 + $0x78] sm:$0xff]
    %v157 = vld [vmem:[%s6] sm:$0x3]
    %v159 = vlaneseq
    %v160 = vshrl.u32 %v159, 7
    %v161 = vsub.s32 0, %v160
    %v162 = vrot.slane %v131, %v161
    %v168 = vunpack.c.l.b16 %v127
    %v169 = vunpack.c.l.b16 %v128
    %v170 = vunpack.c.l.b16 %v129
    %v171 = vunpack.c.l.b16 %v130
    %v172 = vpack.c.b16 %v169, %v168
    %v173 = vpack.c.b16 %v171, %v170
    %vm176 = vcmask 261120
    %v178 = vsel %vm176, %v126, 0
    %180 = vmatprep.subr.bf16.mxu0 0
    %181 = vmatpush1.bf16.msra.mxu0 %v172
    %182 = vmatprep.subr.bf16.mxu0 0
    %183 = vmatpush1.bf16.msra.mxu0 %v173
    %184 = vmatprep.subr.bf16.mxu0 0
    %185 = vmatpush1.bf16.msra.mxu0 0
    %186 = vmatprep.subr.bf16.mxu0 0
    %187 = vmatpush1.bf16.msra.mxu0 0
    %188 = vmatprep.subr.bf16.mxu0 0
    %189 = vmatpush1.bf16.msra.mxu0 0
    %190 = vmatprep.subr.bf16.mxu0 0
    %191 = vmatpush1.bf16.msra.mxu0 0
    %192 = vmatprep.subr.bf16.mxu0 0
    %193 = vmatpush1.bf16.msra.mxu0 0
    %194 = vmatprep.subr.bf16.mxu0 0
    %195 = vmatpush1.bf16.msra.mxu0 0
    %196 = vmatprep.subr.bf16.mxu0 0
    %197 = vmatpush1.bf16.msra.mxu0 0
    %198 = vmatprep.subr.bf16.mxu0 0
    %199 = vmatpush1.bf16.msra.mxu0 0
    %200 = vmatprep.subr.bf16.mxu0 0
    %201 = vmatpush1.bf16.msra.mxu0 0
    %202 = vmatprep.subr.bf16.mxu0 0
    %203 = vmatpush1.bf16.msra.mxu0 0
    %204 = vmatprep.subr.bf16.mxu0 0
    %205 = vmatpush1.bf16.msra.mxu0 0
    %206 = vmatprep.subr.bf16.mxu0 0
    %207 = vmatpush1.bf16.msra.mxu0 0
    %208 = vmatprep.subr.bf16.mxu0 0
    %209 = vmatpush1.bf16.msra.mxu0 0
    %210 = vmatprep.subr.bf16.mxu0 0
    %211 = vmatpush1.bf16.msra.mxu0 0
    %212 = vmatprep.mubr.bf16.mxu0 0
    %213 = vmatmul.mubr.bf16.gmra.mrb[0].mxu0 %v178
    %v214 = vpop.f32.mrb[0].mxu0
    %v215 = vadd.f32 %v162, %v214
    %v216 = vpop.f32.mrb[0].mxu0
    %v217 = vpop.f32.mrb[0].mxu0
    %v218 = vpop.f32.mrb[0].mxu0
    %219 = vdwg.mxu0
    %v220 = vmax.f32 %v215, 0.0
    %v221 = vpack.c.bf16 %v220, %v220
    %v223 = vlaneseq
    %v224 = vshrl.u32 %v223, 7
    %v225 = vsub.s32 0, %v224
    %v226 = vrot.slane %v140, %v225
    %v236 = vunpack.c.l.b16 %v132
    %v237 = vunpack.c.l.b16 %v133
    %v238 = vunpack.c.l.b16 %v134
    %v239 = vunpack.c.l.b16 %v135
    %v240 = vunpack.c.l.b16 %v136
    %v241 = vunpack.c.l.b16 %v137
    %v242 = vunpack.c.l.b16 %v138
    %v243 = vunpack.c.l.b16 %v139
    %v244 = vpack.c.b16 %v237, %v236
    %v245 = vpack.c.b16 %v239, %v238
    %v246 = vpack.c.b16 %v241, %v240
    %v247 = vpack.c.b16 %v243, %v242
    %vm252 = vcmask 523264
    %v254 = vsel %vm252, %v221, 0
    %256 = vmatprep.subr.bf16.mxu0 0
    %257 = vmatpush1.bf16.msra.mxu0 %v244
    %258 = vmatprep.subr.bf16.mxu0 0
    %259 = vmatpush1.bf16.msra.mxu0 %v245
    %260 = vmatprep.subr.bf16.mxu0 0
    %261 = vmatpush1.bf16.msra.mxu0 %v246
    %262 = vmatprep.subr.bf16.mxu0 0
    %263 = vmatpush1.bf16.msra.mxu0 %v247
    %264 = vmatprep.subr.bf16.mxu0 0
    %265 = vmatpush1.bf16.msra.mxu0 0
    %266 = vmatprep.subr.bf16.mxu0 0
    %267 = vmatpush1.bf16.msra.mxu0 0
    %268 = vmatprep.subr.bf16.mxu0 0
    %269 = vmatpush1.bf16.msra.mxu0 0
    %270 = vmatprep.subr.bf16.mxu0 0
    %271 = vmatpush1.bf16.msra.mxu0 0
    %272 = vmatprep.subr.bf16.mxu0 0
    %273 = vmatpush1.bf16.msra.mxu0 0
    %274 = vmatprep.subr.bf16.mxu0 0
    %275 = vmatpush1.bf16.msra.mxu0 0
    %276 = vmatprep.subr.bf16.mxu0 0
    %277 = vmatpush1.bf16.msra.mxu0 0
    %278 = vmatprep.subr.bf16.mxu0 0
    %279 = vmatpush1.bf16.msra.mxu0 0
    %280 = vmatprep.subr.bf16.mxu0 0
    %281 = vmatpush1.bf16.msra.mxu0 0
    %282 = vmatprep.subr.bf16.mxu0 0
    %283 = vmatpush1.bf16.msra.mxu0 0
    %284 = vmatprep.subr.bf16.mxu0 0
    %285 = vmatpush1.bf16.msra.mxu0 0
    %286 = vmatprep.subr.bf16.mxu0 0
    %287 = vmatpush1.bf16.msra.mxu0 0
    %288 = vmatprep.mubr.bf16.mxu0 0
    %289 = vmatmul.mubr.bf16.gmra.mrb[0].mxu0 %v254
    %v290 = vpop.f32.mrb[0].mxu0
    %v291 = vadd.f32 %v226, %v290
    %v292 = vpop.f32.mrb[0].mxu0
    %v293 = vpop.f32.mrb[0].mxu0
    %v294 = vpop.f32.mrb[0].mxu0
    %295 = vdwg.mxu0
    %v296 = vmax.f32 %v291, 0.0
    %v297 = vpack.c.bf16 %v296, %v296
    %v299 = vlaneseq
    %v300 = vshrl.u32 %v299, 7
    %v301 = vsub.s32 0, %v300
    %v302 = vrot.slane %v157, %v301
    %v303 = vlaneseq
    %v304 = vshrl.u32 %v303, 7
    %v305 = vsub.s32 1, %v304
    %v306 = vrot.slane %v157, %v305
    %v325 = vunpack.c.l.b16 %v141
    %v326 = vunpack.c.h.b16 %v141
    %v327 = vunpack.c.l.b16 %v142
    %v328 = vunpack.c.h.b16 %v142
    %v329 = vunpack.c.l.b16 %v143
    %v330 = vunpack.c.h.b16 %v143
    %v331 = vunpack.c.l.b16 %v144
    %v332 = vunpack.c.h.b16 %v144
    %v333 = vunpack.c.l.b16 %v145
    %v334 = vunpack.c.h.b16 %v145
    %v335 = vunpack.c.l.b16 %v146
    %v336 = vunpack.c.h.b16 %v146
    %v337 = vunpack.c.l.b16 %v147
    %v338 = vunpack.c.h.b16 %v147
    %v339 = vunpack.c.l.b16 %v148
    %v340 = vunpack.c.h.b16 %v148
    %v341 = vunpack.c.l.b16 %v149
    %v342 = vunpack.c.h.b16 %v149
    %v343 = vunpack.c.l.b16 %v150
    %v344 = vunpack.c.h.b16 %v150
    %v345 = vunpack.c.l.b16 %v151
    %v346 = vunpack.c.h.b16 %v151
    %v347 = vunpack.c.l.b16 %v152
    %v348 = vunpack.c.h.b16 %v152
    %v349 = vunpack.c.l.b16 %v153
    %v350 = vunpack.c.h.b16 %v153
    %v351 = vunpack.c.l.b16 %v154
    %v352 = vunpack.c.h.b16 %v154
    %v353 = vunpack.c.l.b16 %v155
    %v354 = vunpack.c.h.b16 %v155
    %v355 = vunpack.c.l.b16 %v156
    %v356 = vunpack.c.h.b16 %v156
    %v357 = vpack.c.b16 %v327, %v325
    %v358 = vpack.c.b16 %v328, %v326
    %v359 = vpack.c.b16 %v331, %v329
    %v360 = vpack.c.b16 %v332, %v330
    %v361 = vpack.c.b16 %v335, %v333
    %v362 = vpack.c.b16 %v336, %v334
    %v363 = vpack.c.b16 %v339, %v337
    %v364 = vpack.c.b16 %v340, %v338
    %v365 = vpack.c.b16 %v343, %v341
    %v366 = vpack.c.b16 %v344, %v342
    %v367 = vpack.c.b16 %v347, %v345
    %v368 = vpack.c.b16 %v348, %v346
    %v369 = vpack.c.b16 %v351, %v349
    %v370 = vpack.c.b16 %v352, %v350
    %v371 = vpack.c.b16 %v355, %v353
    %v372 = vpack.c.b16 %v356, %v354
    %389 = vmatprep.subr.bf16.mxu0 %v358
    %390 = vmatpush1.bf16.msra.mxu0 %v357
    %391 = vmatprep.subr.bf16.mxu0 %v360
    %392 = vmatpush1.bf16.msra.mxu0 %v359
    %393 = vmatprep.subr.bf16.mxu0 %v362
    %394 = vmatpush1.bf16.msra.mxu0 %v361
    %395 = vmatprep.subr.bf16.mxu0 %v364
    %396 = vmatpush1.bf16.msra.mxu0 %v363
    %397 = vmatprep.subr.bf16.mxu0 %v366
    %398 = vmatpush1.bf16.msra.mxu0 %v365
    %399 = vmatprep.subr.bf16.mxu0 %v368
    %400 = vmatpush1.bf16.msra.mxu0 %v367
    %401 = vmatprep.subr.bf16.mxu0 %v370
    %402 = vmatpush1.bf16.msra.mxu0 %v369
    %403 = vmatprep.subr.bf16.mxu0 %v372
    %404 = vmatpush1.bf16.msra.mxu0 %v371
    %405 = vmatprep.subr.bf16.mxu0 0
    %406 = vmatpush1.bf16.msra.mxu0 0
    %407 = vmatprep.subr.bf16.mxu0 0
    %408 = vmatpush1.bf16.msra.mxu0 0
    %409 = vmatprep.subr.bf16.mxu0 0
    %410 = vmatpush1.bf16.msra.mxu0 0
    %411 = vmatprep.subr.bf16.mxu0 0
    %412 = vmatpush1.bf16.msra.mxu0 0
    %413 = vmatprep.subr.bf16.mxu0 0
    %414 = vmatpush1.bf16.msra.mxu0 0
    %415 = vmatprep.subr.bf16.mxu0 0
    %416 = vmatpush1.bf16.msra.mxu0 0
    %417 = vmatprep.subr.bf16.mxu0 0
    %418 = vmatpush1.bf16.msra.mxu0 0
    %419 = vmatprep.subr.bf16.mxu0 0
    %420 = vmatpush1.bf16.msra.mxu0 0
    %421 = vmatprep.mubr.bf16.mxu0 0
    %422 = vmatmul.mubr.bf16.gmra.mrb[0].mxu0 %v297
    %v423 = vpop.f32.mrb[0].mxu0
    %v424 = vadd.f32 %v302, %v423
    %v425 = vpop.f32.mrb[0].mxu0
    %v426 = vadd.f32 %v306, %v425
    %v427 = vpop.f32.mrb[0].mxu0
    %v428 = vpop.f32.mrb[0].mxu0
    %429 = vdwg.mxu0
    %v430 = vmax.f32 %v424, 0.0
    %v431 = vmax.f32 %v426, 0.0
    %v432 = vlaneseq
    %v433 = vshrl.u32 %v432, 7
    %vm434 = vcmp.lt.s32.totalorder %v433, 8
    %v435 = vsel %vm434, 1, 0
    %v436 = vcvt.s32.f32 %v435
    %v437 = vmul.f32 %v430, %v436
    %v438 = vmul.f32 %v431, %v436
    %v439 = vrot.slane %v437, 4
    %v440 = vadd.f32 %v437, %v439
    %v441 = vrot.slane %v440, 2
    %v442 = vadd.f32 %v440, %v441
    %v443 = vrot.slane %v442, 1
    %v444 = vadd.f32 %v442, %v443
    %v445 = vrot.slane %v438, 4
    %v446 = vadd.f32 %v438, %v445
    %v447 = vrot.slane %v446, 2
    %v448 = vadd.f32 %v446, %v447
    %v449 = vrot.slane %v448, 1
    %v450 = vadd.f32 %v448, %v449
    %v451 = vmul.f32 %v444, 0.125
    %v452 = vmul.f32 %v450, 0.125
    %v453 = vmul.f32 %v437, %v437
    %v454 = vmul.f32 %v438, %v438
    %v455 = vrot.slane %v453, 4
    %v456 = vadd.f32 %v453, %v455
    %v457 = vrot.slane %v456, 2
    %v458 = vadd.f32 %v456, %v457
    %v459 = vrot.slane %v458, 1
    %v460 = vadd.f32 %v458, %v459
    %v461 = vrot.slane %v454, 4
    %v462 = vadd.f32 %v454, %v461
    %v463 = vrot.slane %v462, 2
    %v464 = vadd.f32 %v462, %v463
    %v465 = vrot.slane %v464, 1
    %v466 = vadd.f32 %v464, %v465
    %v467 = vmul.f32 %v460, 0.125
    %v468 = vmul.f32 %v466, 0.125
    %v469 = vmul.f32 %v451, %v451
    %v470 = vmul.f32 %v452, %v452
    %v471 = vsub.f32 %v467, %v469
    %v472 = vsub.f32 %v468, %v470
    %v473 = vmax.f32 %v471, 0.0
    %v474 = vmax.f32 %v472, 0.0
    %v475 = vld [vmem:[%s7] sm:$0x3]
    %v476 = vadd.f32 %v473, 1e-05
    %v477 = vadd.f32 %v474, 1e-05
    %v478 = vrsqrt.pop %v476
    %v479 = vrsqrt.pop %v477
    %v482 = vcombine.low %v478, %v479
    %v484 = vunpack.c.l.s4 1966171168
    %v485 = vunpack.c.0.s8 %v484
    %v486 = vlaneseq
    %v487 = vshrl.u32 %v486, 7
    %v488 = vsub.s32 %v485, %v487
    %v489 = vrot.slane %v482, %v488
    %v491 = vunpack.c.l.s4 1966171168
    %v492 = vunpack.c.0.s8 %v491
    %v493 = vlaneseq
    %v494 = vshrl.u32 %v493, 7
    %v495 = vsub.s32 %v492, %v494
    %v496 = vrot.slane %v489, %v495
    %v498 = vmul.f32 %v475, %v496
    %v499 = vld [vmem:[%s8] sm:$0x3]
    %v501 = vlaneseq
    %v502 = vshrl.u32 %v501, 7
    %v503 = vsub.s32 0, %v502
    %v504 = vrot.slane %v498, %v503
    %v505 = vlaneseq
    %v506 = vshrl.u32 %v505, 7
    %v507 = vsub.s32 1, %v506
    %v508 = vrot.slane %v498, %v507
    %v511 = vmul.f32 %v451, %v504
    %v512 = vmul.f32 %v452, %v508
    %v515 = vcombine.low %v511, %v512
    %v517 = vunpack.c.l.s4 1966171168
    %v518 = vunpack.c.0.s8 %v517
    %v519 = vlaneseq
    %v520 = vshrl.u32 %v519, 7
    %v521 = vsub.s32 %v518, %v520
    %v522 = vrot.slane %v515, %v521
    %v524 = vunpack.c.l.s4 1966171168
    %v525 = vunpack.c.0.s8 %v524
    %v526 = vlaneseq
    %v527 = vshrl.u32 %v526, 7
    %v528 = vsub.s32 %v525, %v527
    %v529 = vrot.slane %v522, %v528
    %v531 = vsub.f32 %v499, %v529
    %v532 = vmul.f32 %v430, %v504
    %v533 = vmul.f32 %v431, %v508
    %v535 = vlaneseq
    %v536 = vshrl.u32 %v535, 7
    %v537 = vsub.s32 0, %v536
    %v538 = vrot.slane %v531, %v537
    %v539 = vlaneseq
    %v540 = vshrl.u32 %v539, 7
    %v541 = vsub.s32 1, %v540
    %v542 = vrot.slane %v531, %v541
    %v545 = vadd.f32 %v532, %v538
    %v546 = vadd.f32 %v533, %v542
    %v547 = vld [vmem:[#allocation10] sm:$0xf]
    %v548 = vld [vmem:[#allocation10 + $0x4] sm:$0xf]
    %v549 = vld [vmem:[#allocation10 + $0x8] sm:$0xf]
    %v550 = vld [vmem:[#allocation10 + $0xc] sm:$0xf]
    %v551 = vld [vmem:[#allocation10 + $0x10] sm:$0xf]
    %v552 = vld [vmem:[#allocation10 + $0x14] sm:$0xf]
    %v553 = vld [vmem:[#allocation10 + $0x18] sm:$0xf]
    %v554 = vld [vmem:[#allocation10 + $0x1c] sm:$0xf]
    %v555 = vld [vmem:[#allocation10 + $0x20] sm:$0xf]
    %v556 = vld [vmem:[#allocation10 + $0x24] sm:$0xf]
    %v557 = vld [vmem:[#allocation10 + $0x28] sm:$0xf]
    %v558 = vld [vmem:[#allocation10 + $0x2c] sm:$0xf]
    %v559 = vld [vmem:[#allocation10 + $0x30] sm:$0xf]
    %v560 = vld [vmem:[#allocation10 + $0x34] sm:$0xf]
    %v561 = vld [vmem:[#allocation10 + $0x38] sm:$0xf]
    %v562 = vld [vmem:[#allocation10 + $0x3c] sm:$0xf]
    %v563 = vld [vmem:[#allocation10 + $0x40] sm:$0xf]
    %v564 = vld [vmem:[#allocation10 + $0x44] sm:$0xf]
    %v565 = vld [vmem:[#allocation10 + $0x48] sm:$0xf]
    %v566 = vld [vmem:[#allocation10 + $0x4c] sm:$0xf]
    %v567 = vld [vmem:[#allocation10 + $0x50] sm:$0xf]
    %v568 = vld [vmem:[#allocation10 + $0x54] sm:$0xf]
    %v569 = vld [vmem:[#allocation10 + $0x58] sm:$0xf]
    %v570 = vld [vmem:[#allocation10 + $0x5c] sm:$0xf]
    %v571 = vld [vmem:[#allocation10 + $0x60] sm:$0xf]
    %v572 = vld [vmem:[#allocation10 + $0x64] sm:$0xf]
    %v573 = vld [vmem:[#allocation10 + $0x68] sm:$0xf]
    %v574 = vld [vmem:[#allocation10 + $0x6c] sm:$0xf]
    %v575 = vld [vmem:[#allocation10 + $0x70] sm:$0xf]
    %v576 = vld [vmem:[#allocation10 + $0x74] sm:$0xf]
    %v577 = vld [vmem:[#allocation10 + $0x78] sm:$0xf]
    %v578 = vld [vmem:[#allocation10 + $0x7c] sm:$0xf]
    %v579 = vld [vmem:[%s10] sm:$0x1]
    %v580 = vld [vmem:[#allocation11] sm:$0xf]
    %v581 = vld [vmem:[#allocation11 + $0x4] sm:$0xf]
    %v582 = vld [vmem:[#allocation11 + $0x8] sm:$0xf]
    %v583 = vld [vmem:[#allocation11 + $0xc] sm:$0xf]
    %v584 = vld [vmem:[#allocation11 + $0x10] sm:$0xf]
    %v585 = vld [vmem:[#allocation11 + $0x14] sm:$0xf]
    %v586 = vld [vmem:[#allocation11 + $0x18] sm:$0xf]
    %v587 = vld [vmem:[#allocation11 + $0x1c] sm:$0xf]
    %v588 = vld [vmem:[#allocation11 + $0x20] sm:$0xf]
    %v589 = vld [vmem:[#allocation11 + $0x24] sm:$0xf]
    %v590 = vld [vmem:[#allocation11 + $0x28] sm:$0xf]
    %v591 = vld [vmem:[#allocation11 + $0x2c] sm:$0xf]
    %v592 = vld [vmem:[#allocation11 + $0x30] sm:$0xf]
    %v593 = vld [vmem:[#allocation11 + $0x34] sm:$0xf]
    %v594 = vld [vmem:[#allocation11 + $0x38] sm:$0xf]
    %v595 = vld [vmem:[#allocation11 + $0x3c] sm:$0xf]
    %v596 = vld [vmem:[%s12] sm:$0x1]
    %v597 = vpack.c.bf16 %v545, %v545
    %v598 = vpack.c.bf16 %v546, %v546
    %v600 = vlaneseq
    %v601 = vshrl.u32 %v600, 7
    %v602 = vsub.s32 0, %v601
    %v603 = vrot.slane %v579, %v602
    %v637 = vunpack.c.l.b16 %v547
    %v638 = vunpack.c.l.b16 %v548
    %v639 = vunpack.c.l.b16 %v549
    %v640 = vunpack.c.l.b16 %v550
    %v641 = vunpack.c.l.b16 %v551
    %v642 = vunpack.c.l.b16 %v552
    %v643 = vunpack.c.l.b16 %v553
    %v644 = vunpack.c.l.b16 %v554
    %v645 = vunpack.c.l.b16 %v555
    %v646 = vunpack.c.l.b16 %v556
    %v647 = vunpack.c.l.b16 %v557
    %v648 = vunpack.c.l.b16 %v558
    %v649 = vunpack.c.l.b16 %v559
    %v650 = vunpack.c.l.b16 %v560
    %v651 = vunpack.c.l.b16 %v561
    %v652 = vunpack.c.l.b16 %v562
    %v653 = vunpack.c.l.b16 %v563
    %v654 = vunpack.c.l.b16 %v564
    %v655 = vunpack.c.l.b16 %v565
    %v656 = vunpack.c.l.b16 %v566
    %v657 = vunpack.c.l.b16 %v567
    %v658 = vunpack.c.l.b16 %v568
    %v659 = vunpack.c.l.b16 %v569
    %v660 = vunpack.c.l.b16 %v570
    %v661 = vunpack.c.l.b16 %v571
    %v662 = vunpack.c.l.b16 %v572
    %v663 = vunpack.c.l.b16 %v573
    %v664 = vunpack.c.l.b16 %v574
    %v665 = vunpack.c.l.b16 %v575
    %v666 = vunpack.c.l.b16 %v576
    %v667 = vunpack.c.l.b16 %v577
    %v668 = vunpack.c.l.b16 %v578
    %v669 = vpack.c.b16 %v638, %v637
    %v670 = vpack.c.b16 %v640, %v639
    %v671 = vpack.c.b16 %v642, %v641
    %v672 = vpack.c.b16 %v644, %v643
    %v673 = vpack.c.b16 %v646, %v645
    %v674 = vpack.c.b16 %v648, %v647
    %v675 = vpack.c.b16 %v650, %v649
    %v676 = vpack.c.b16 %v652, %v651
    %v677 = vpack.c.b16 %v654, %v653
    %v678 = vpack.c.b16 %v656, %v655
    %v679 = vpack.c.b16 %v658, %v657
    %v680 = vpack.c.b16 %v660, %v659
    %v681 = vpack.c.b16 %v662, %v661
    %v682 = vpack.c.b16 %v664, %v663
    %v683 = vpack.c.b16 %v666, %v665
    %v684 = vpack.c.b16 %v668, %v667
    %701 = vmatprep.subr.bf16.mxu0 0
    %702 = vmatpush1.bf16.msra.mxu0 %v669
    %703 = vmatprep.subr.bf16.mxu0 0
    %704 = vmatpush1.bf16.msra.mxu0 %v670
    %705 = vmatprep.subr.bf16.mxu0 0
    %706 = vmatpush1.bf16.msra.mxu0 %v671
    %707 = vmatprep.subr.bf16.mxu0 0
    %708 = vmatpush1.bf16.msra.mxu0 %v672
    %709 = vmatprep.subr.bf16.mxu0 0
    %710 = vmatpush1.bf16.msra.mxu0 %v673
    %711 = vmatprep.subr.bf16.mxu0 0
    %712 = vmatpush1.bf16.msra.mxu0 %v674
    %713 = vmatprep.subr.bf16.mxu0 0
    %714 = vmatpush1.bf16.msra.mxu0 %v675
    %715 = vmatprep.subr.bf16.mxu0 0
    %716 = vmatpush1.bf16.msra.mxu0 %v676
    %717 = vmatprep.subr.bf16.mxu0 0
    %718 = vmatpush1.bf16.msra.mxu0 %v677
    %719 = vmatprep.subr.bf16.mxu0 0
    %720 = vmatpush1.bf16.msra.mxu0 %v678
    %721 = vmatprep.subr.bf16.mxu0 0
    %722 = vmatpush1.bf16.msra.mxu0 %v679
    %723 = vmatprep.subr.bf16.mxu0 0
    %724 = vmatpush1.bf16.msra.mxu0 %v680
    %725 = vmatprep.subr.bf16.mxu0 0
    %726 = vmatpush1.bf16.msra.mxu0 %v681
    %727 = vmatprep.subr.bf16.mxu0 0
    %728 = vmatpush1.bf16.msra.mxu0 %v682
    %729 = vmatprep.subr.bf16.mxu0 0
    %730 = vmatpush1.bf16.msra.mxu0 %v683
    %731 = vmatprep.subr.bf16.mxu0 0
    %732 = vmatpush1.bf16.msra.mxu0 %v684
    %733 = vmatprep.mubr.bf16.mxu0 %v598
    %734 = vmatmul.mubr.bf16.gmra.mrb[0].mxu0 %v597
    %v735 = vpop.f32.mrb[0].mxu0
    %v736 = vadd.f32 %v603, %v735
    %v737 = vpop.f32.mrb[0].mxu0
    %v738 = vpop.f32.mrb[0].mxu0
    %v739 = vpop.f32.mrb[0].mxu0
    %740 = vdwg.mxu0
    %v741 = vmax.f32 %v736, 0.0
    %v742 = vpack.c.bf16 %v741, %v741
    %v744 = vlaneseq
    %v745 = vshrl.u32 %v744, 7
    %v746 = vsub.s32 0, %v745
    %v747 = vrot.slane %v596, %v746
    %v765 = vunpack.c.l.b16 %v580
    %v766 = vunpack.c.l.b16 %v581
    %v767 = vunpack.c.l.b16 %v582
    %v768 = vunpack.c.l.b16 %v583
    %v769 = vunpack.c.l.b16 %v584
    %v770 = vunpack.c.l.b16 %v585
    %v771 = vunpack.c.l.b16 %v586
    %v772 = vunpack.c.l.b16 %v587
    %v773 = vunpack.c.l.b16 %v588
    %v774 = vunpack.c.l.b16 %v589
    %v775 = vunpack.c.l.b16 %v590
    %v776 = vunpack.c.l.b16 %v591
    %v777 = vunpack.c.l.b16 %v592
    %v778 = vunpack.c.l.b16 %v593
    %v779 = vunpack.c.l.b16 %v594
    %v780 = vunpack.c.l.b16 %v595
    %v781 = vpack.c.b16 %v766, %v765
    %v782 = vpack.c.b16 %v768, %v767
    %v783 = vpack.c.b16 %v770, %v769
    %v784 = vpack.c.b16 %v772, %v771
    %v785 = vpack.c.b16 %v774, %v773
    %v786 = vpack.c.b16 %v776, %v775
    %v787 = vpack.c.b16 %v778, %v777
    %v788 = vpack.c.b16 %v780, %v779
    %797 = vmatprep.subr.bf16.mxu0 0
    %798 = vmatpush1.bf16.msra.mxu0 %v781
    %799 = vmatprep.subr.bf16.mxu0 0
    %800 = vmatpush1.bf16.msra.mxu0 %v782
    %801 = vmatprep.subr.bf16.mxu0 0
    %802 = vmatpush1.bf16.msra.mxu0 %v783
    %803 = vmatprep.subr.bf16.mxu0 0
    %804 = vmatpush1.bf16.msra.mxu0 %v784
    %805 = vmatprep.subr.bf16.mxu0 0
    %806 = vmatpush1.bf16.msra.mxu0 %v785
    %807 = vmatprep.subr.bf16.mxu0 0
    %808 = vmatpush1.bf16.msra.mxu0 %v786
    %809 = vmatprep.subr.bf16.mxu0 0
    %810 = vmatpush1.bf16.msra.mxu0 %v787
    %811 = vmatprep.subr.bf16.mxu0 0
    %812 = vmatpush1.bf16.msra.mxu0 %v788
    %813 = vmatprep.subr.bf16.mxu0 0
    %814 = vmatpush1.bf16.msra.mxu0 0
    %815 = vmatprep.subr.bf16.mxu0 0
    %816 = vmatpush1.bf16.msra.mxu0 0
    %817 = vmatprep.subr.bf16.mxu0 0
    %818 = vmatpush1.bf16.msra.mxu0 0
    %819 = vmatprep.subr.bf16.mxu0 0
    %820 = vmatpush1.bf16.msra.mxu0 0
    %821 = vmatprep.subr.bf16.mxu0 0
    %822 = vmatpush1.bf16.msra.mxu0 0
    %823 = vmatprep.subr.bf16.mxu0 0
    %824 = vmatpush1.bf16.msra.mxu0 0
    %825 = vmatprep.subr.bf16.mxu0 0
    %826 = vmatpush1.bf16.msra.mxu0 0
    %827 = vmatprep.subr.bf16.mxu0 0
    %828 = vmatpush1.bf16.msra.mxu0 0
    %829 = vmatprep.mubr.bf16.mxu0 0
    %830 = vmatmul.mubr.bf16.gmra.mrb[0].mxu0 %v742
    %v831 = vpop.f32.mrb[0].mxu0
    %v832 = vadd.f32 %v747, %v831
    %v833 = vpop.f32.mrb[0].mxu0
    %v834 = vpop.f32.mrb[0].mxu0
    %v835 = vpop.f32.mrb[0].mxu0
    %836 = vdwg.mxu0
    %vm837 = vcmask 64512
    %838 = vst.msk [vmem:[#allocation13] sm:$0xff] %vm837, %v832
    // Predicated region
    $region78: #{tpu_custom_call.1} parent=1 // pred_check
      _
    $region79: #{tpu_custom_call.1} parent=1 // pred_check_branch
      %840 = sbr.rel (0) target = $region81
    $region80: #{tpu_custom_call.1} parent=1 // pred_region
      %s842 = ssub.s32 128, 128
      %843 = vsyncadd [#allocation4], %s842
      %s845 = sshll.u32 [#allocation13], 4
      %s846 = int_to_ptr.vmem [resolvable:$true] %s845
      %848 = dma.vmem_to_hbm [thread:$0]  %s846, 128, %s13, [#allocation4]
    $region81: #{tpu_custom_call.1} parent=1 // pred_fallthru
      _
    // Predicated region
    $region82: #{tpu_custom_call.1} parent=1 // pred_check
      _
    $region83: #{tpu_custom_call.1} parent=1 // pred_check_branch
      %850 = sbr.rel (0) target = $region85
    $region84: #{tpu_custom_call.1} parent=1 // pred_region
      %851 = dma.done [#allocation4], 128
    $region85: #{tpu_custom_call.1} parent=1 // pred_fallthru
      _
    %852 = vsyncpa [#allocation3], 1
    %853 = vsyncpa [#allocation6], 1
    %854 = vsyncpa [#allocation9], 1
    %855 = vsyncpa [#allocation12], 1
    %856 = vsyncpa [#allocation4], 1

</llo_original>
